<compile_context>
chip_gen: v6e
topology: v6e:2x2x1
jax: 0.10.0
libtpu: 0.0.40
codegen_flags: <defaults>
</compile_context>

<pallas_src>
import functools

import jax
import jax.numpy as jnp
from jax.experimental import pallas as pl
from jax.experimental.pallas import tpu as pltpu


# ----------------------------------------------------------------------------
# Fused kernel: streamed backbone reduction + fc + projection head
# ----------------------------------------------------------------------------
def _fused_kernel(p_ref, wc_ref, bc_ref, wcomb_ref, bcomb_ref, g_ref, beta_ref,
                  w2_ref, b2_ref, o_ref, acc_ref, *, inv_p, p_valid, needs_mask):
    """One grid step processes a [B, PT, K] slab of im2col patches.

    p_ref     : [B, PT, K]        bf16 im2col patches (K = 9*C_in)
    wc_ref    : [K, F_pad]        bf16 conv weight (lane-padded)
    bc_ref    : [1, F_pad]        f32  conv bias (zero-padded)
    wcomb_ref : [F_pad, M4_pad]   bf16 fused (net.fc @ head.linear1) weight
    bcomb_ref : [1, M4_pad]       f32  fused bias (zero-padded)
    g_ref     : [1, M4_pad]       f32  BN gamma (zero-padded)
    beta_ref  : [1, M4_pad]       f32  BN beta (zero-padded)
    w2_ref    : [M4_pad, Ppad]    bf16 head.linear2 weight (lane-padded)
    b2_ref    : [1, Ppad]         f32  head.linear2 bias (zero-padded)
    o_ref     : [B, Ppad]         f32  lane-dense output (sliced in wrapper)
    acc_ref   : [B, F_pad]        f32  VMEM scratch, running spatial sum
    """
    pt = pl.program_id(0)

    @pl.when(pt == 0)
    def _():
        acc_ref[...] = jnp.zeros_like(acc_ref)

    # --- backbone tile: 3x3 conv as ONE 2D MXU matmul (M = B*PT), ReLU, sum ---
    b, ptile, k = p_ref.shape
    f = wc_ref.shape[1]
    p = p_ref[...].reshape(b * ptile, k)                       # bf16, long M
    conv = jnp.dot(p, wc_ref[...], preferred_element_type=jnp.float32)
    act = jnp.maximum(conv + bc_ref[...], 0.0)                 # f32 [B*PT, F_pad]
    act3 = act.reshape(b, ptile, f)
    if needs_mask:
        # P was padded to a multiple of PT in the wrapper; padded patch rows
        # are all-zero but would still contribute relu(bias) -- mask exactly.
        row = pt * ptile + jax.lax.broadcasted_iota(jnp.int32, (1, ptile, 1), 1)
        act3 = jnp.where(row < p_valid, act3, 0.0)
    acc_ref[...] += act3.sum(axis=1)                           # pool accumulate

    # --- head: runs once, after the last spatial tile -------------------------
    @pl.when(pt == pl.num_programs(0) - 1)
    def _():
        feats = acc_ref[...] * inv_p                           # global avg pool

        # net.fc + head.linear1 fused:  feats @ (wfc @ w1) + (bfc @ w1 + b1)
        h = jnp.dot(feats.astype(jnp.bfloat16), wcomb_ref[...],
                    preferred_element_type=jnp.float32) + bcomb_ref[...]

        # head.bn1: BatchNorm1d, training-mode batch stats (biased var, eps=1e-5)
        # folded into one scale/shift FMA.  Padded columns: h == 0, gamma == 0,
        # beta == 0  =>  scale == 0, shift == 0  =>  stay exactly 0.
        mu = jnp.mean(h, axis=0, keepdims=True)
        d = h - mu
        var = jnp.mean(d * d, axis=0, keepdims=True)
        scale = g_ref[...] * jax.lax.rsqrt(var + 1e-5)
        shift = beta_ref[...] - mu * scale
        h = h * scale + shift

        # head.relu1: LeakyReLU(negative_slope=0.01)
        h = jnp.where(h >= 0.0, h, 0.01 * h)

        # head.linear2 -> lane-dense padded output
        o_ref[...] = (jnp.dot(h.astype(jnp.bfloat16), w2_ref[...],
                              preferred_element_type=jnp.float32)
                      + b2_ref[...])


# ----------------------------------------------------------------------------
# Wrapper (layout / algebraic fusion / pallas_call plumbing)
# ----------------------------------------------------------------------------
def _round_up(n, m):
    return ((n + m - 1) // m) * m


def _im2col_3x3(x_nchw):
    """NCHW -> [B, H*W, 9*C] patches for a 3x3, stride 1, pad 1 conv."""
    x = jnp.transpose(x_nchw, (0, 2, 3, 1))                # -> NHWC
    B, H, W, C = x.shape
    xp = jnp.pad(x, ((0, 0), (1, 1), (1, 1), (0, 0)))
    taps = [xp[:, dh:dh + H, dw:dw + W, :] for dh in range(3) for dw in range(3)]
    p = jnp.concatenate(taps, axis=-1)                     # [B, H, W, 9*C]
    return p.reshape(B, H * W, 9 * C)


def model_forward(x_nchw, params):
    LANE = 128

    # Cast to bf16 BEFORE im2col: the 9x-expanded patch tensor and every
    # wrapper-side intermediate are half-width in HBM.
    patches = _im2col_3x3(x_nchw.astype(jnp.bfloat16))     # [B, P, K] bf16
    B, P, K = patches.shape

    F = params["wc"].shape[1]
    M4 = params["w1"].shape[1]
    proj = params["w2"].shape[1]
    F_pad = _round_up(F, LANE)
    M4_pad = _round_up(M4, LANE)
    proj_pad = _round_up(proj, LANE)

    # --- lane-pad weights (zeros; MXU operands in bf16, affine terms f32) -----
    wc = jnp.pad(params["wc"], ((0, 0), (0, F_pad - F))).astype(jnp.bfloat16)
    bc = jnp.pad(params["bc"], ((0, 0), (0, F_pad - F)))
    # Algebraic fusion of net.fc and head.linear1 (no nonlinearity between them).
    w_comb = params["wfc"] @ params["w1"]                  # [F, 4M]
    w_comb = jnp.pad(w_comb, ((0, F_pad - F), (0, M4_pad - M4))).astype(jnp.bfloat16)
    b_comb = jnp.pad(params["bfc"] @ params["w1"] + params["b1"],
                     ((0, 0), (0, M4_pad - M4)))
    gamma = jnp.pad(params["gamma"], ((0, 0), (0, M4_pad - M4)))
    beta = jnp.pad(params["beta"], ((0, 0), (0, M4_pad - M4)))
    w2 = jnp.pad(params["w2"],
                 ((0, M4_pad - M4), (0, proj_pad - proj))).astype(jnp.bfloat16)
    b2 = jnp.pad(params["b2"], ((0, 0), (0, proj_pad - proj)))

    const_bytes = ((K * F_pad + F_pad * M4_pad + M4_pad * proj_pad) * 2   # bf16 W
                   + (F_pad + 3 * M4_pad + proj_pad) * 4)                 # f32 vecs
    acc_bytes = B * F_pad * 4

    # --- PT from a VMEM budget (<= half of v7x's 64 MiB physical VMEM) --------
    VMEM_BUDGET = 32 * 1024 * 1024
    if P <= 2048:
        PT = P                                             # single block, grid=(1,)
        P_pad = P
    else:
        PT = 512
        for cand in (2048, 1024):
            if 2 * B * cand * K * 2 + const_bytes + acc_bytes <= VMEM_BUDGET:
                PT = cand
                break
        P_pad = _round_up(P, PT)
    needs_mask = P_pad != P
    if needs_mask:
        patches = jnp.pad(patches, ((0, 0), (0, P_pad - P), (0, 0)))
    grid = (P_pad // PT,)

    # Explicit VMEM limit: streamed double-buffer + single-buffered constants
    # + accumulator + f32 activation tile, with 2x headroom.
    stream_bytes = 2 * B * PT * K * 2
    work_bytes = B * PT * F_pad * 4
    vmem_limit = int(min(max(2 * (stream_bytes + const_bytes + acc_bytes + work_bytes),
                             16 * 1024 * 1024),
                         64 * 1024 * 1024))

    flops = (2 * B * P_pad * K * F_pad           # conv matmul
             + 2 * B * F_pad * M4_pad            # fused fc + linear1
             + 2 * B * M4_pad * proj_pad)        # linear2
    bytes_accessed = (B * P_pad * K * 2          # patch stream (bf16)
                      + const_bytes
                      + B * proj_pad * 4)        # output
    cost = pl.CostEstimate(flops=flops, transcendentals=M4_pad,
                           bytes_accessed=bytes_accessed)

    full = lambda pt: (0, 0)                     # constants: one resident block

    def const_spec(shape):
        # index_map is constant across the grid -> single buffer is enough.
        return pl.BlockSpec(shape, full, pipeline_mode=pl.Buffered(1))

    out_pad = pl.pallas_call(
        functools.partial(_fused_kernel, inv_p=1.0 / float(P),
                          p_valid=P, needs_mask=needs_mask),
        out_shape=jax.ShapeDtypeStruct((B, proj_pad), jnp.float32),
        grid_spec=pltpu.PrefetchScalarGridSpec(
            num_scalar_prefetch=0,
            grid=grid,
            in_specs=[
                # streamed patch tile: the only operand that needs double-buffering
                pl.BlockSpec((B, PT, K), lambda pt: (0, pt, 0),
                             pipeline_mode=pl.Buffered(2)),
                const_spec((K, F_pad)),                     # conv weight
                const_spec((1, F_pad)),                     # conv bias
                const_spec((F_pad, M4_pad)),                # fused fc+linear1 W
                const_spec((1, M4_pad)),                    # fused bias
                const_spec((1, M4_pad)),                    # BN gamma
                const_spec((1, M4_pad)),                    # BN beta
                const_spec((M4_pad, proj_pad)),             # linear2 W
                const_spec((1, proj_pad)),                  # linear2 b
            ],
            out_specs=pl.BlockSpec((B, proj_pad), full),
            scratch_shapes=[pltpu.VMEM((B, F_pad), jnp.float32)],
        ),
        compiler_params=pltpu.CompilerParams(
            # single grid axis = pooled (reduction) axis; BN needs the whole
            # batch in one program, so no batch tiling here.
            dimension_semantics=("arbitrary",),
            vmem_limit_bytes=vmem_limit,
        ),
        cost_estimate=cost,
    )(patches, wc, bc, w_comb, b_comb, gamma, beta, w2, b2)

    return out_pad[:, :proj]


# ----------------------------------------------------------------------------
# Deterministic parameter construction (synthetic, no checkpoint)
# ----------------------------------------------------------------------------
def make_params(key, c_in, feature_size, moco_dim, projection_size):
    ks = jax.random.split(key, 6)
    scale = 0.05
    return {
        # synthetic conv stem (stand-in backbone)
        "wc":  scale * jax.random.normal(ks[0], (9 * c_in, feature_size), jnp.float32),
        "bc":  jnp.zeros((1, feature_size), jnp.float32),
        # net.fc
        "wfc": scale * jax.random.normal(ks[1], (feature_size, moco_dim), jnp.float32),
        "bfc": 0.01 * jnp.ones((1, moco_dim), jnp.float32),
        # head.linear1
        "w1":  scale * jax.random.normal(ks[2], (moco_dim, 4 * moco_dim), jnp.float32),
        "b1":  0.01 * jnp.ones((1, 4 * moco_dim), jnp.float32),
        # head.bn1 (affine params; training-mode batch stats used in-kernel)
        "gamma": jnp.ones((1, 4 * moco_dim), jnp.float32),
        "beta":  jnp.zeros((1, 4 * moco_dim), jnp.float32),
        # head.linear2
        "w2":  scale * jax.random.normal(ks[3], (4 * moco_dim, projection_size), jnp.float32),
        "b2":  0.01 * jnp.ones((1, projection_size), jnp.float32),
    }


if __name__ == "__main__":
    # Small shapes consistent with the CIFAR-style module:
    #   batch=2, 3-channel 16x16 image, feature_size=32, moco_dim=16, projection=8
    B, C_IN, H, W = 2, 3, 16, 16
    FEATURE_SIZE, MOCO_DIM, PROJECTION_SIZE = 32, 16, 8

    key = jax.random.PRNGKey(0)
    kx, kp = jax.random.split(key)
    x = jax.random.normal(kx, (B, C_IN, H, W), dtype=jnp.float32)   # NCHW like PyTorch
    params = make_params(kp, C_IN, FEATURE_SIZE, MOCO_DIM, PROJECTION_SIZE)

    out = jax.jit(model_forward)(x, params)
    jax.block_until_ready(out)
    assert out.shape == (B, PROJECTION_SIZE), out.shape
    assert bool(jnp.all(jnp.isfinite(out))), "non-finite output"
    print("KERNEL_OK")
</pallas_src>

<mosaic_0001>
module attributes {stable_mosaic.version = 11 : i64} {
  func.func @_fused_kernel(%arg0: i32, %arg1: memref<2x256x27xbf16, #tpu.memory_space<vmem>>, %arg2: memref<27x128xbf16, #tpu.memory_space<vmem>>, %arg3: memref<1x128xf32, #tpu.memory_space<vmem>>, %arg4: memref<128x128xbf16, #tpu.memory_space<vmem>>, %arg5: memref<1x128xf32, #tpu.memory_space<vmem>>, %arg6: memref<1x128xf32, #tpu.memory_space<vmem>>, %arg7: memref<1x128xf32, #tpu.memory_space<vmem>>, %arg8: memref<128x128xbf16, #tpu.memory_space<vmem>>, %arg9: memref<1x128xf32, #tpu.memory_space<vmem>>, %arg10: memref<2x128xf32, #tpu.memory_space<vmem>>, %arg11: memref<2x128xf32, #tpu.memory_space<vmem>>) attributes {dimension_semantics = [#tpu.dimension_semantics<arbitrary>], iteration_bounds = array<i64: 1>, scalar_prefetch = 0 : i64, scratch_operands = 1 : i64, tpu.core_type = #tpu.core_type<tc>, window_params = [{pipeline_mode = #tpu.pipeline_mode<double_buffered>, transform_indices = @transform_0, window_bounds = array<i64: 2, 256, 27>}, {pipeline_mode = #tpu.pipeline_mode<synchronous>, transform_indices = @transform_1, window_bounds = array<i64: 27, 128>}, {pipeline_mode = #tpu.pipeline_mode<synchronous>, transform_indices = @transform_2, window_bounds = array<i64: 1, 128>}, {pipeline_mode = #tpu.pipeline_mode<synchronous>, transform_indices = @transform_3, window_bounds = array<i64: 128, 128>}, {pipeline_mode = #tpu.pipeline_mode<synchronous>, transform_indices = @transform_4, window_bounds = array<i64: 1, 128>}, {pipeline_mode = #tpu.pipeline_mode<synchronous>, transform_indices = @transform_5, window_bounds = array<i64: 1, 128>}, {pipeline_mode = #tpu.pipeline_mode<synchronous>, transform_indices = @transform_6, window_bounds = array<i64: 1, 128>}, {pipeline_mode = #tpu.pipeline_mode<synchronous>, transform_indices = @transform_7, window_bounds = array<i64: 128, 128>}, {pipeline_mode = #tpu.pipeline_mode<synchronous>, transform_indices = @transform_8, window_bounds = array<i64: 1, 128>}, {pipeline_mode = #tpu.pipeline_mode<synchronous>, transform_indices = @transform_9, window_bounds = array<i64: 2, 128>}]} {
    %c0_i32 = arith.constant 0 : i32
    %0 = arith.cmpi eq, %arg0, %c0_i32 : i32
    %1 = arith.extui %0 : i1 to i32
    %c0_i32_0 = arith.constant 0 : i32
    %2 = arith.cmpi ne, %1, %c0_i32_0 : i32
    scf.if %2 {
      %cst_15 = arith.constant 0.000000e+00 : f32
      %20 = vector.broadcast %cst_15 : f32 to vector<2x128xf32>
      %c0_16 = arith.constant 0 : index
      %c0_17 = arith.constant 0 : index
      %21 = vector.load %arg11[%c0_16, %c0_17] : memref<2x128xf32, #tpu.memory_space<vmem>>, vector<2x128xf32>
      tpu.vector_store %arg11[%c0_16, %c0_17], %20 {strides = array<i32>} : memref<2x128xf32, #tpu.memory_space<vmem>>, vector<2x128xf32>,
    } else {
    }
    %c0 = arith.constant 0 : index
    %c0_1 = arith.constant 0 : index
    %c0_2 = arith.constant 0 : index
    %3 = vector.load %arg1[%c0, %c0_1, %c0_2] : memref<2x256x27xbf16, #tpu.memory_space<vmem>>, vector<2x256x27xbf16>
    %4 = vector.shape_cast %3 : vector<2x256x27xbf16> to vector<512x27xbf16>
    %c0_3 = arith.constant 0 : index
    %c0_4 = arith.constant 0 : index
    %5 = vector.load %arg2[%c0_3, %c0_4] : memref<27x128xbf16, #tpu.memory_space<vmem>>, vector<27x128xbf16>
    %cst = arith.constant dense<0.000000e+00> : vector<512x128xf32>
    %6 = tpu.matmul %4, %5, %cst {dimension_numbers = #tpu.dot_dimension_numbers<[1], [0], [0], [1], [0, 0, 1, 1], [], []>} : vector<512x27xbf16>, vector<27x128xbf16>, vector<512x128xf32> -> vector<512x128xf32>
    %c0_5 = arith.constant 0 : index
    %c0_6 = arith.constant 0 : index
    %7 = vector.load %arg3[%c0_5, %c0_6] : memref<1x128xf32, #tpu.memory_space<vmem>>, vector<1x128xf32>
    %8 = vector.broadcast %7 : vector<1x128xf32> to vector<512x128xf32>
    %9 = arith.addf %6, %8 : vector<512x128xf32>
    %cst_7 = arith.constant 0.000000e+00 : f32
    %10 = vector.broadcast %cst_7 : f32 to vector<512x128xf32>
    %11 = arith.maximumf %9, %10 : vector<512x128xf32>
    %12 = vector.shape_cast %11 : vector<512x128xf32> to vector<2x256x128xf32>
    %c0_8 = arith.constant 0 : index
    %c0_9 = arith.constant 0 : index
    %13 = vector.load %arg11[%c0_8, %c0_9] : memref<2x128xf32, #tpu.memory_space<vmem>>, vector<2x128xf32>
    %cst_10 = arith.constant dense<0.000000e+00> : vector<2x128xf32>
    %14 = vector.multi_reduction <add>, %12, %cst_10 [1] : vector<2x256x128xf32> to vector<2x128xf32>
    %15 = arith.addf %13, %14 : vector<2x128xf32>
    %c0_11 = arith.constant 0 : index
    %c0_12 = arith.constant 0 : index
    %16 = vector.load %arg11[%c0_11, %c0_12] : memref<2x128xf32, #tpu.memory_space<vmem>>, vector<2x128xf32>
    tpu.vector_store %arg11[%c0_11, %c0_12], %15 {strides = array<i32>} : memref<2x128xf32, #tpu.memory_space<vmem>>, vector<2x128xf32>,
    %c0_i32_13 = arith.constant 0 : i32
    %17 = arith.cmpi eq, %arg0, %c0_i32_13 : i32
    %18 = arith.extui %17 : i1 to i32
    %c0_i32_14 = arith.constant 0 : i32
    %19 = arith.cmpi ne, %18, %c0_i32_14 : i32
    scf.if %19 {
      %c0_15 = arith.constant 0 : index
      %c0_16 = arith.constant 0 : index
      %20 = vector.load %arg11[%c0_15, %c0_16] : memref<2x128xf32, #tpu.memory_space<vmem>>, vector<2x128xf32>
      %cst_17 = arith.constant 3.906250e-03 : f32
      %21 = vector.broadcast %cst_17 : f32 to vector<2x128xf32>
      %22 = arith.mulf %20, %21 : vector<2x128xf32>
      %23 = arith.truncf %22 : vector<2x128xf32> to vector<2x128xbf16>
      %c0_18 = arith.constant 0 : index
      %c0_19 = arith.constant 0 : index
      %24 = vector.load %arg4[%c0_18, %c0_19] : memref<128x128xbf16, #tpu.memory_space<vmem>>, vector<128x128xbf16>
      %cst_20 = arith.constant dense<0.000000e+00> : vector<2x128xf32>
      %25 = tpu.matmul %23, %24, %cst_20 {dimension_numbers = #tpu.dot_dimension_numbers<[1], [0], [0], [1], [0, 0, 1, 1], [], []>} : vector<2x128xbf16>, vector<128x128xbf16>, vector<2x128xf32> -> vector<2x128xf32>
      %c0_21 = arith.constant 0 : index
      %c0_22 = arith.constant 0 : index
      %26 = vector.load %arg5[%c0_21, %c0_22] : memref<1x128xf32, #tpu.memory_space<vmem>>, vector<1x128xf32>
      %27 = vector.broadcast %26 : vector<1x128xf32> to vector<2x128xf32>
      %28 = arith.addf %25, %27 : vector<2x128xf32>
      %cst_23 = arith.constant dense<0.000000e+00> : vector<128xf32>
      %29 = vector.multi_reduction <add>, %28, %cst_23 [0] : vector<2x128xf32> to vector<128xf32>
      %30 = vector.shape_cast %29 : vector<128xf32> to vector<1x128xf32>
      %cst_24 = arith.constant 2.000000e+00 : f32
      %31 = vector.broadcast %cst_24 : f32 to vector<1x128xf32>
      %32 = arith.divf %30, %31 : vector<1x128xf32>
      %33 = vector.broadcast %32 : vector<1x128xf32> to vector<2x128xf32>
      %34 = arith.subf %28, %33 : vector<2x128xf32>
      %35 = arith.mulf %34, %34 : vector<2x128xf32>
      %cst_25 = arith.constant dense<0.000000e+00> : vector<128xf32>
      %36 = vector.multi_reduction <add>, %35, %cst_25 [0] : vector<2x128xf32> to vector<128xf32>
      %37 = vector.shape_cast %36 : vector<128xf32> to vector<1x128xf32>
      %cst_26 = arith.constant 2.000000e+00 : f32
      %38 = vector.broadcast %cst_26 : f32 to vector<1x128xf32>
      %39 = arith.divf %37, %38 : vector<1x128xf32>
      %c0_27 = arith.constant 0 : index
      %c0_28 = arith.constant 0 : index
      %40 = vector.load %arg6[%c0_27, %c0_28] : memref<1x128xf32, #tpu.memory_space<vmem>>, vector<1x128xf32>
      %cst_29 = arith.constant 9.99999974E-6 : f32
      %41 = vector.broadcast %cst_29 : f32 to vector<1x128xf32>
      %42 = arith.addf %39, %41 : vector<1x128xf32>
      %43 = math.rsqrt %42 : vector<1x128xf32>
      %44 = arith.mulf %40, %43 : vector<1x128xf32>
      %c0_30 = arith.constant 0 : index
      %c0_31 = arith.constant 0 : index
      %45 = vector.load %arg7[%c0_30, %c0_31] : memref<1x128xf32, #tpu.memory_space<vmem>>, vector<1x128xf32>
      %46 = arith.mulf %32, %44 : vector<1x128xf32>
      %47 = arith.subf %45, %46 : vector<1x128xf32>
      %48 = vector.broadcast %44 : vector<1x128xf32> to vector<2x128xf32>
      %49 = arith.mulf %28, %48 : vector<2x128xf32>
      %50 = vector.broadcast %47 : vector<1x128xf32> to vector<2x128xf32>
      %51 = arith.addf %49, %50 : vector<2x128xf32>
      %cst_32 = arith.constant 0.000000e+00 : f32
      %52 = vector.broadcast %cst_32 : f32 to vector<2x128xf32>
      %53 = arith.cmpf oge, %51, %52 : vector<2x128xf32>
      %cst_33 = arith.constant 0.00999999977 : f32
      %54 = vector.broadcast %cst_33 : f32 to vector<2x128xf32>
      %55 = arith.mulf %54, %51 : vector<2x128xf32>
      %56 = arith.select %53, %51, %55 : vector<2x128xi1>, vector<2x128xf32>
      %57 = arith.truncf %56 : vector<2x128xf32> to vector<2x128xbf16>
      %c0_34 = arith.constant 0 : index
      %c0_35 = arith.constant 0 : index
      %58 = vector.load %arg8[%c0_34, %c0_35] : memref<128x128xbf16, #tpu.memory_space<vmem>>, vector<128x128xbf16>
      %cst_36 = arith.constant dense<0.000000e+00> : vector<2x128xf32>
      %59 = tpu.matmul %57, %58, %cst_36 {dimension_numbers = #tpu.dot_dimension_numbers<[1], [0], [0], [1], [0, 0, 1, 1], [], []>} : vector<2x128xbf16>, vector<128x128xbf16>, vector<2x128xf32> -> vector<2x128xf32>
      %c0_37 = arith.constant 0 : index
      %c0_38 = arith.constant 0 : index
      %60 = vector.load %arg9[%c0_37, %c0_38] : memref<1x128xf32, #tpu.memory_space<vmem>>, vector<1x128xf32>
      %61 = vector.broadcast %60 : vector<1x128xf32> to vector<2x128xf32>
      %62 = arith.addf %59, %61 : vector<2x128xf32>
      %c0_39 = arith.constant 0 : index
      %c0_40 = arith.constant 0 : index
      %63 = vector.load %arg10[%c0_39, %c0_40] : memref<2x128xf32, #tpu.memory_space<vmem>>, vector<2x128xf32>
      tpu.vector_store %arg10[%c0_39, %c0_40], %62 {strides = array<i32>} : memref<2x128xf32, #tpu.memory_space<vmem>>, vector<2x128xf32>,
    } else {
    }
    return
  }
  func.func @transform_0(%arg0: i32) -> (i32, i32, i32) {
    %c0_i32 = arith.constant 0 : i32
    %c0_i32_0 = arith.constant 0 : i32
    %c0_i32_1 = arith.constant 0 : i32
    return %c0_i32, %arg0, %c0_i32_0 : i32, i32, i32
  }
  func.func @transform_1(%arg0: i32) -> (i32, i32) {
    %c0_i32 = arith.constant 0 : i32
    %c0_i32_0 = arith.constant 0 : i32
    %c0_i32_1 = arith.constant 0 : i32
    return %c0_i32, %c0_i32_0 : i32, i32
  }
  func.func @transform_2(%arg0: i32) -> (i32, i32) {
    %c0_i32 = arith.constant 0 : i32
    %c0_i32_0 = arith.constant 0 : i32
    %c0_i32_1 = arith.constant 0 : i32
    return %c0_i32, %c0_i32_0 : i32, i32
  }
  func.func @transform_3(%arg0: i32) -> (i32, i32) {
    %c0_i32 = arith.constant 0 : i32
    %c0_i32_0 = arith.constant 0 : i32
    %c0_i32_1 = arith.constant 0 : i32
    return %c0_i32, %c0_i32_0 : i32, i32
  }
  func.func @transform_4(%arg0: i32) -> (i32, i32) {
    %c0_i32 = arith.constant 0 : i32
    %c0_i32_0 = arith.constant 0 : i32
    %c0_i32_1 = arith.constant 0 : i32
    return %c0_i32, %c0_i32_0 : i32, i32
  }
  func.func @transform_5(%arg0: i32) -> (i32, i32) {
    %c0_i32 = arith.constant 0 : i32
    %c0_i32_0 = arith.constant 0 : i32
    %c0_i32_1 = arith.constant 0 : i32
    return %c0_i32, %c0_i32_0 : i32, i32
  }
  func.func @transform_6(%arg0: i32) -> (i32, i32) {
    %c0_i32 = arith.constant 0 : i32
    %c0_i32_0 = arith.constant 0 : i32
    %c0_i32_1 = arith.constant 0 : i32
    return %c0_i32, %c0_i32_0 : i32, i32
  }
  func.func @transform_7(%arg0: i32) -> (i32, i32) {
    %c0_i32 = arith.constant 0 : i32
    %c0_i32_0 = arith.constant 0 : i32
    %c0_i32_1 = arith.constant 0 : i32
    return %c0_i32, %c0_i32_0 : i32, i32
  }
  func.func @transform_8(%arg0: i32) -> (i32, i32) {
    %c0_i32 = arith.constant 0 : i32
    %c0_i32_0 = arith.constant 0 : i32
    %c0_i32_1 = arith.constant 0 : i32
    return %c0_i32, %c0_i32_0 : i32, i32
  }
  func.func @transform_9(%arg0: i32) -> (i32, i32) {
    %c0_i32 = arith.constant 0 : i32
    %c0_i32_0 = arith.constant 0 : i32
    %c0_i32_1 = arith.constant 0 : i32
    return %c0_i32, %c0_i32_0 : i32, i32
  }
}

</mosaic_0001>

<llo_original>
// kernel: model_forward.1
$region0: #{model_forward.1}
  #allocation0 [shape = 'u32[]', space=smem, size = 0x4, offset = 0x4, fixed_abs, tag = 'smem constant byte address 0x4 - core index']
  #allocation1 [shape = 'u32[144,128]{1,0:T(1,128)}', space=vmem, size = 0x12000, scoped, tag = 'internal scratch']
  #allocation2 [shape = 'f32[2,128]{1,0:T(2,128)}', space=vmem, size = 0x400, scoped, tag = 'scratch operand']
  %s0 = inlined_call_operand.vmem [shape: bf16[2,256,27], index: 0, kind: input, shape index: {}]
  %s1 = inlined_call_operand.vmem [shape: bf16[27,128], index: 1, kind: input, shape index: {}]
  %s2 = inlined_call_operand.vmem [shape: f32[1,128], index: 2, kind: input, shape index: {}]
  %s3 = inlined_call_operand.vmem [shape: bf16[128,128], index: 3, kind: input, shape index: {}]
  %s4 = inlined_call_operand.vmem [shape: f32[1,128], index: 4, kind: input, shape index: {}]
  %s5 = inlined_call_operand.vmem [shape: f32[1,128], index: 5, kind: input, shape index: {}]
  %s6 = inlined_call_operand.vmem [shape: f32[1,128], index: 6, kind: input, shape index: {}]
  %s7 = inlined_call_operand.vmem [shape: bf16[128,128], index: 7, kind: input, shape index: {}]
  %s8 = inlined_call_operand.vmem [shape: f32[1,128], index: 8, kind: input, shape index: {}]
  %s9 = inlined_call_operand.hbm [shape: f32[2,128], index: 9, kind: output, shape index: {}]
  %s10 = sld [smem:[#allocation0]]
  $region54: #{model_forward.1} parent=0
    _
  %s12 = ssub.s32 1, %s10
  %s13 = scalar_select 0, %s12, %s10
  $region1: #{model_forward.1} parent=0
    #allocation3 [shape = 'u8[1024]{0}', space=vmem, size = 0x400, scoped, tag = 'output window, operand 0, single buffered']
    #allocation4 [shape = 's32[1]{0}', space=sflag, size = 0x4, scoped, tag = 'scoped memory for model_forward.1']
    %14 = vsyncpa [#allocation4], 0
    // Predicated region
    $region2: #{model_forward.1} parent=1 // pred_check
      _
    $region3: #{model_forward.1} parent=1 // pred_check_branch
      %16 = sbr.rel (0) target = $region5
    $region4: #{model_forward.1} parent=1 // pred_region
      _
    $region5: #{model_forward.1} parent=1 // pred_fallthru
      _
    // Predicated region
    $region6: #{model_forward.1} parent=1 // pred_check
      _
    $region7: #{model_forward.1} parent=1 // pred_check_branch
      %18 = sbr.rel (0) target = $region9
    $region8: #{model_forward.1} parent=1 // pred_region
      _
    $region9: #{model_forward.1} parent=1 // pred_fallthru
      _
    // Predicated region
    $region10: #{model_forward.1} parent=1 // pred_check
      _
    $region11: #{model_forward.1} parent=1 // pred_check_branch
      %20 = sbr.rel (0) target = $region13
    $region12: #{model_forward.1} parent=1 // pred_region
      _
    $region13: #{model_forward.1} parent=1 // pred_fallthru
      _
    // Predicated region
    $region14: #{model_forward.1} parent=1 // pred_check
      _
    $region15: #{model_forward.1} parent=1 // pred_check_branch
      %22 = sbr.rel (0) target = $region17
    $region16: #{model_forward.1} parent=1 // pred_region
      _
    $region17: #{model_forward.1} parent=1 // pred_fallthru
      _
    // Predicated region
    $region18: #{model_forward.1} parent=1 // pred_check
      _
    $region19: #{model_forward.1} parent=1 // pred_check_branch
      %24 = sbr.rel (0) target = $region21
    $region20: #{model_forward.1} parent=1 // pred_region
      _
    $region21: #{model_forward.1} parent=1 // pred_fallthru
      _
    // Predicated region
    $region22: #{model_forward.1} parent=1 // pred_check
      _
    $region23: #{model_forward.1} parent=1 // pred_check_branch
      %26 = sbr.rel (0) target = $region25
    $region24: #{model_forward.1} parent=1 // pred_region
      _
    $region25: #{model_forward.1} parent=1 // pred_fallthru
      _
    // Predicated region
    $region26: #{model_forward.1} parent=1 // pred_check
      _
    $region27: #{model_forward.1} parent=1 // pred_check_branch
      %28 = sbr.rel (0) target = $region29
    $region28: #{model_forward.1} parent=1 // pred_region
      _
    $region29: #{model_forward.1} parent=1 // pred_fallthru
      _
    // Predicated region
    $region30: #{model_forward.1} parent=1 // pred_check
      _
    $region31: #{model_forward.1} parent=1 // pred_check_branch
      %30 = sbr.rel (0) target = $region33
    $region32: #{model_forward.1} parent=1 // pred_region
      _
    $region33: #{model_forward.1} parent=1 // pred_fallthru
      _
    // Predicated region
    $region34: #{model_forward.1} parent=1 // pred_check
      _
    $region35: #{model_forward.1} parent=1 // pred_check_branch
      %32 = sbr.rel (0) target = $region37
    $region36: #{model_forward.1} parent=1 // pred_region
      _
    $region37: #{model_forward.1} parent=1 // pred_fallthru
      _
    %p34 = scmp.eq.s32.totalorder 0, 0
    // Predicated region
    $region38: #{model_forward.1} parent=1 // pred_check
      %p35 = pneg %p34
    $region39: #{model_forward.1} parent=1 // pred_check_branch
      %37 = sbr.rel (%p35) target = $region41
    $region40: #{model_forward.1} parent=1 // pred_region
      %38 = vst [vmem:[#allocation2] sm:$0x3] 0.0
    $region41: #{model_forward.1} parent=1 // pred_fallthru
      _
    %v39 = vld [vmem:[%s0] sm:$0xf]
    %v40 = vld [vmem:[%s0 + $0x4] sm:$0xf]
    %v41 = vld [vmem:[%s0 + $0x8] sm:$0xf]
    %v42 = vld [vmem:[%s0 + $0xc] sm:$0xf]
    %v43 = vld [vmem:[%s0 + $0x10] sm:$0xf]
    %v44 = vld [vmem:[%s0 + $0x14] sm:$0xf]
    %v45 = vld [vmem:[%s0 + $0x18] sm:$0xf]
    %v46 = vld [vmem:[%s0 + $0x1c] sm:$0xf]
    %v47 = vld [vmem:[%s0 + $0x20] sm:$0xf]
    %v48 = vld [vmem:[%s0 + $0x24] sm:$0xf]
    %v49 = vld [vmem:[%s0 + $0x28] sm:$0xf]
    %v50 = vld [vmem:[%s0 + $0x2c] sm:$0xf]
    %v51 = vld [vmem:[%s0 + $0x30] sm:$0xf]
    %v52 = vld [vmem:[%s0 + $0x34] sm:$0xf]
    %v53 = vld [vmem:[%s0 + $0x38] sm:$0xf]
    %v54 = vld [vmem:[%s0 + $0x3c] sm:$0xf]
    %v55 = vld [vmem:[%s0 + $0x40] sm:$0xf]
    %v56 = vld [vmem:[%s0 + $0x44] sm:$0xf]
    %v57 = vld [vmem:[%s0 + $0x48] sm:$0xf]
    %v58 = vld [vmem:[%s0 + $0x4c] sm:$0xf]
    %v59 = vld [vmem:[%s0 + $0x50] sm:$0xf]
    %v60 = vld [vmem:[%s0 + $0x54] sm:$0xf]
    %v61 = vld [vmem:[%s0 + $0x58] sm:$0xf]
    %v62 = vld [vmem:[%s0 + $0x5c] sm:$0xf]
    %v63 = vld [vmem:[%s0 + $0x60] sm:$0xf]
    %v64 = vld [vmem:[%s0 + $0x64] sm:$0xf]
    %v65 = vld [vmem:[%s0 + $0x68] sm:$0xf]
    %v66 = vld [vmem:[%s0 + $0x6c] sm:$0xf]
    %v67 = vld [vmem:[%s0 + $0x70] sm:$0xf]
    %v68 = vld [vmem:[%s0 + $0x74] sm:$0xf]
    %v69 = vld [vmem:[%s0 + $0x78] sm:$0xf]
    %v70 = vld [vmem:[%s0 + $0x7c] sm:$0xf]
    %v71 = vld [vmem:[%s0 + $0x80] sm:$0xf]
    %v72 = vld [vmem:[%s0 + $0x84] sm:$0xf]
    %v73 = vld [vmem:[%s0 + $0x88] sm:$0xf]
    %v74 = vld [vmem:[%s0 + $0x8c] sm:$0xf]
    %v75 = vld [vmem:[%s0 + $0x90] sm:$0xf]
    %v76 = vld [vmem:[%s0 + $0x94] sm:$0xf]
    %v77 = vld [vmem:[%s0 + $0x98] sm:$0xf]
    %v78 = vld [vmem:[%s0 + $0x9c] sm:$0xf]
    %v79 = vld [vmem:[%s0 + $0xa0] sm:$0xf]
    %v80 = vld [vmem:[%s0 + $0xa4] sm:$0xf]
    %v81 = vld [vmem:[%s0 + $0xa8] sm:$0xf]
    %v82 = vld [vmem:[%s0 + $0xac] sm:$0xf]
    %v83 = vld [vmem:[%s0 + $0xb0] sm:$0xf]
    %v84 = vld [vmem:[%s0 + $0xb4] sm:$0xf]
    %v85 = vld [vmem:[%s0 + $0xb8] sm:$0xf]
    %v86 = vld [vmem:[%s0 + $0xbc] sm:$0xf]
    %v87 = vld [vmem:[%s0 + $0xc0] sm:$0xf]
    %v88 = vld [vmem:[%s0 + $0xc4] sm:$0xf]
    %v89 = vld [vmem:[%s0 + $0xc8] sm:$0xf]
    %v90 = vld [vmem:[%s0 + $0xcc] sm:$0xf]
    %v91 = vld [vmem:[%s0 + $0xd0] sm:$0xf]
    %v92 = vld [vmem:[%s0 + $0xd4] sm:$0xf]
    %v93 = vld [vmem:[%s0 + $0xd8] sm:$0xf]
    %v94 = vld [vmem:[%s0 + $0xdc] sm:$0xf]
    %v95 = vld [vmem:[%s0 + $0xe0] sm:$0xf]
    %v96 = vld [vmem:[%s0 + $0xe4] sm:$0xf]
    %v97 = vld [vmem:[%s0 + $0xe8] sm:$0xf]
    %v98 = vld [vmem:[%s0 + $0xec] sm:$0xf]
    %v99 = vld [vmem:[%s0 + $0xf0] sm:$0xf]
    %v100 = vld [vmem:[%s0 + $0xf4] sm:$0xf]
    %v101 = vld [vmem:[%s0 + $0xf8] sm:$0xf]
    %v102 = vld [vmem:[%s0 + $0xfc] sm:$0xf]
    %v103 = vld [vmem:[%s1] sm:$0xf]
    %v104 = vld [vmem:[%s1 + $0x4] sm:$0xf]
    %v105 = vld [vmem:[%s1 + $0x8] sm:$0xf]
    %v106 = vld [vmem:[%s1 + $0xc] sm:$0x3]
    %v107 = vld [vmem:[%s2] sm:$0x1]
    %v109 = vlaneseq
    %v110 = vshrl.u32 %v109, 7
    %v111 = vsub.s32 0, %v110
    %v112 = vrot.slane %v107, %v111
    %v178 = vunpack.c.l.b16 %v39
    %v179 = vunpack.c.l.b16 %v40
    %v180 = vunpack.c.l.b16 %v41
    %v181 = vunpack.c.l.b16 %v42
    %v182 = vunpack.c.l.b16 %v43
    %v183 = vunpack.c.l.b16 %v44
    %v184 = vunpack.c.l.b16 %v45
    %v185 = vunpack.c.l.b16 %v46
    %v186 = vunpack.c.l.b16 %v47
    %v187 = vunpack.c.l.b16 %v48
    %v188 = vunpack.c.l.b16 %v49
    %v189 = vunpack.c.l.b16 %v50
    %v190 = vunpack.c.l.b16 %v51
    %v191 = vunpack.c.l.b16 %v52
    %v192 = vunpack.c.l.b16 %v53
    %v193 = vunpack.c.l.b16 %v54
    %v194 = vunpack.c.l.b16 %v55
    %v195 = vunpack.c.l.b16 %v56
    %v196 = vunpack.c.l.b16 %v57
    %v197 = vunpack.c.l.b16 %v58
    %v198 = vunpack.c.l.b16 %v59
    %v199 = vunpack.c.l.b16 %v60
    %v200 = vunpack.c.l.b16 %v61
    %v201 = vunpack.c.l.b16 %v62
    %v202 = vunpack.c.l.b16 %v63
    %v203 = vunpack.c.l.b16 %v64
    %v204 = vunpack.c.l.b16 %v65
    %v205 = vunpack.c.l.b16 %v66
    %v206 = vunpack.c.l.b16 %v67
    %v207 = vunpack.c.l.b16 %v68
    %v208 = vunpack.c.l.b16 %v69
    %v209 = vunpack.c.l.b16 %v70
    %v210 = vunpack.c.l.b16 %v71
    %v211 = vunpack.c.l.b16 %v72
    %v212 = vunpack.c.l.b16 %v73
    %v213 = vunpack.c.l.b16 %v74
    %v214 = vunpack.c.l.b16 %v75
    %v215 = vunpack.c.l.b16 %v76
    %v216 = vunpack.c.l.b16 %v77
    %v217 = vunpack.c.l.b16 %v78
    %v218 = vunpack.c.l.b16 %v79
    %v219 = vunpack.c.l.b16 %v80
    %v220 = vunpack.c.l.b16 %v81
    %v221 = vunpack.c.l.b16 %v82
    %v222 = vunpack.c.l.b16 %v83
    %v223 = vunpack.c.l.b16 %v84
    %v224 = vunpack.c.l.b16 %v85
    %v225 = vunpack.c.l.b16 %v86
    %v226 = vunpack.c.l.b16 %v87
    %v227 = vunpack.c.l.b16 %v88
    %v228 = vunpack.c.l.b16 %v89
    %v229 = vunpack.c.l.b16 %v90
    %v230 = vunpack.c.l.b16 %v91
    %v231 = vunpack.c.l.b16 %v92
    %v232 = vunpack.c.l.b16 %v93
    %v233 = vunpack.c.l.b16 %v94
    %v234 = vunpack.c.l.b16 %v95
    %v235 = vunpack.c.l.b16 %v96
    %v236 = vunpack.c.l.b16 %v97
    %v237 = vunpack.c.l.b16 %v98
    %v238 = vunpack.c.l.b16 %v99
    %v239 = vunpack.c.l.b16 %v100
    %v240 = vunpack.c.l.b16 %v101
    %v241 = vunpack.c.l.b16 %v102
    %v242 = vpack.c.b16 %v179, %v178
    %v243 = vpack.c.b16 %v181, %v180
    %v244 = vpack.c.b16 %v183, %v182
    %v245 = vpack.c.b16 %v185, %v184
    %v246 = vpack.c.b16 %v187, %v186
    %v247 = vpack.c.b16 %v189, %v188
    %v248 = vpack.c.b16 %v191, %v190
    %v249 = vpack.c.b16 %v193, %v192
    %v250 = vpack.c.b16 %v195, %v194
    %v251 = vpack.c.b16 %v197, %v196
    %v252 = vpack.c.b16 %v199, %v198
    %v253 = vpack.c.b16 %v201, %v200
    %v254 = vpack.c.b16 %v203, %v202
    %v255 = vpack.c.b16 %v205, %v204
    %v256 = vpack.c.b16 %v207, %v206
    %v257 = vpack.c.b16 %v209, %v208
    %v258 = vpack.c.b16 %v211, %v210
    %v259 = vpack.c.b16 %v213, %v212
    %v260 = vpack.c.b16 %v215, %v214
    %v261 = vpack.c.b16 %v217, %v216
    %v262 = vpack.c.b16 %v219, %v218
    %v263 = vpack.c.b16 %v221, %v220
    %v264 = vpack.c.b16 %v223, %v222
    %v265 = vpack.c.b16 %v225, %v224
    %v266 = vpack.c.b16 %v227, %v226
    %v267 = vpack.c.b16 %v229, %v228
    %v268 = vpack.c.b16 %v231, %v230
    %v269 = vpack.c.b16 %v233, %v232
    %v270 = vpack.c.b16 %v235, %v234
    %v271 = vpack.c.b16 %v237, %v236
    %v272 = vpack.c.b16 %v239, %v238
    %v273 = vpack.c.b16 %v241, %v240
    %v278 = vunpack.c.l.b16 %v103
    %v279 = vunpack.c.l.b16 %v104
    %v280 = vunpack.c.l.b16 %v105
    %v281 = vunpack.c.l.b16 %v106
    %v282 = vpack.c.b16 %v279, %v278
    %v283 = vpack.c.b16 %v281, %v280
    %vm285 = vcmask 220160
    %v287 = vsel %vm285, %v242, 0
    %v290 = vsel %vm285, %v243, 0
    %v293 = vsel %vm285, %v244, 0
    %v296 = vsel %vm285, %v245, 0
    %v299 = vsel %vm285, %v246, 0
    %v302 = vsel %vm285, %v247, 0
    %v305 = vsel %vm285, %v248, 0
    %v308 = vsel %vm285, %v249, 0
    %v311 = vsel %vm285, %v250, 0
    %v314 = vsel %vm285, %v251, 0
    %v317 = vsel %vm285, %v252, 0
    %v320 = vsel %vm285, %v253, 0
    %v323 = vsel %vm285, %v254, 0
    %v326 = vsel %vm285, %v255, 0
    %v329 = vsel %vm285, %v256, 0
    %v332 = vsel %vm285, %v257, 0
    %v335 = vsel %vm285, %v258, 0
    %v338 = vsel %vm285, %v259, 0
    %v341 = vsel %vm285, %v260, 0
    %v344 = vsel %vm285, %v261, 0
    %v347 = vsel %vm285, %v262, 0
    %v350 = vsel %vm285, %v263, 0
    %v353 = vsel %vm285, %v264, 0
    %v356 = vsel %vm285, %v265, 0
    %v359 = vsel %vm285, %v266, 0
    %v362 = vsel %vm285, %v267, 0
    %v365 = vsel %vm285, %v268, 0
    %v368 = vsel %vm285, %v269, 0
    %v371 = vsel %vm285, %v270, 0
    %v374 = vsel %vm285, %v271, 0
    %v377 = vsel %vm285, %v272, 0
    %v380 = vsel %vm285, %v273, 0
    %vm382 = vcmask 1044480
    %vm383 = vcmask 1045504
    %v384 = vsel %vm382, 4294967295, 65535
    %v385 = vsel %vm383, %v384, 0
    %v387 = vand.u32 %v283, %v385
    %389 = vmatprep.subr.bf16.mxu0 0
    %390 = vmatpush1.bf16.msra.mxu0 0
    %391 = vmatprep.subr.bf16.mxu0 0
    %392 = vmatpush1.bf16.msra.mxu0 0
    %393 = vmatprep.subr.bf16.mxu0 0
    %394 = vmatpush1.bf16.msra.mxu0 0
    %395 = vmatprep.subr.bf16.mxu0 0
    %396 = vmatpush1.bf16.msra.mxu0 0
    %397 = vmatprep.subr.bf16.mxu0 0
    %398 = vmatpush1.bf16.msra.mxu0 0
    %399 = vmatprep.subr.bf16.mxu0 0
    %400 = vmatpush1.bf16.msra.mxu0 0
    %401 = vmatprep.subr.bf16.mxu0 0
    %402 = vmatpush1.bf16.msra.mxu0 %v387
    %403 = vmatprep.subr.bf16.mxu0 0
    %404 = vmatpush1.bf16.msra.mxu0 %v282
    %405 = vmatprep.subr.bf16.mxu0 0
    %406 = vmatpush2.bf16.msra.mxu0 0
    %407 = vmatprep.subr.bf16.mxu0 0
    %408 = vmatpush2.bf16.msra.mxu0 0
    %409 = vmatprep.subr.bf16.mxu0 0
    %410 = vmatpush2.bf16.msra.mxu0 0
    %411 = vmatprep.subr.bf16.mxu0 0
    %412 = vmatpush2.bf16.msra.mxu0 0
    %413 = vmatprep.subr.bf16.mxu0 0
    %414 = vmatpush2.bf16.msra.mxu0 0
    %415 = vmatprep.subr.bf16.mxu0 0
    %416 = vmatpush2.bf16.msra.mxu0 0
    %417 = vmatprep.subr.bf16.mxu0 0
    %418 = vmatpush2.bf16.msra.mxu0 0
    %419 = vmatprep.subr.bf16.mxu0 0
    %420 = vmatpush2.bf16.msra.mxu0 0
    %421 = vmatprep.mubr.bf16.mxu0 0
    %422 = vmatmul.mubr.bf16.gmra.mxu0 %v287
    %v423 = vpop.f32.mrf.mxu0
    %v424 = vadd.f32 %v112, %v423
    %v425 = vpop.f32.mrf.mxu0
    %v426 = vpop.f32.mrf.mxu0
    %v427 = vadd.f32 %v112, %v426
    %v428 = vpop.f32.mrf.mxu0
    %429 = vmatprep.mubr.bf16.mxu0 0
    %430 = vmatmul.mubr.bf16.gmra.mxu0 %v290
    %v431 = vpop.f32.mrf.mxu0
    %v432 = vadd.f32 %v112, %v431
    %v433 = vpop.f32.mrf.mxu0
    %v434 = vpop.f32.mrf.mxu0
    %v435 = vadd.f32 %v112, %v434
    %v436 = vpop.f32.mrf.mxu0
    %437 = vmatprep.mubr.bf16.mxu0 0
    %438 = vmatmul.mubr.bf16.gmra.mxu0 %v293
    %v439 = vpop.f32.mrf.mxu0
    %v440 = vadd.f32 %v112, %v439
    %v441 = vpop.f32.mrf.mxu0
    %v442 = vpop.f32.mrf.mxu0
    %v443 = vadd.f32 %v112, %v442
    %v444 = vpop.f32.mrf.mxu0
    %445 = vmatprep.mubr.bf16.mxu0 0
    %446 = vmatmul.mubr.bf16.gmra.mxu0 %v296
    %v447 = vpop.f32.mrf.mxu0
    %v448 = vadd.f32 %v112, %v447
    %v449 = vpop.f32.mrf.mxu0
    %v450 = vpop.f32.mrf.mxu0
    %v451 = vadd.f32 %v112, %v450
    %v452 = vpop.f32.mrf.mxu0
    %453 = vmatprep.mubr.bf16.mxu0 0
    %454 = vmatmul.mubr.bf16.gmra.mxu0 %v299
    %v455 = vpop.f32.mrf.mxu0
    %v456 = vadd.f32 %v112, %v455
    %v457 = vpop.f32.mrf.mxu0
    %v458 = vpop.f32.mrf.mxu0
    %v459 = vadd.f32 %v112, %v458
    %v460 = vpop.f32.mrf.mxu0
    %461 = vmatprep.mubr.bf16.mxu0 0
    %462 = vmatmul.mubr.bf16.gmra.mxu0 %v302
    %v463 = vpop.f32.mrf.mxu0
    %v464 = vadd.f32 %v112, %v463
    %v465 = vpop.f32.mrf.mxu0
    %v466 = vpop.f32.mrf.mxu0
    %v467 = vadd.f32 %v112, %v466
    %v468 = vpop.f32.mrf.mxu0
    %469 = vmatprep.mubr.bf16.mxu0 0
    %470 = vmatmul.mubr.bf16.gmra.mxu0 %v305
    %v471 = vpop.f32.mrf.mxu0
    %v472 = vadd.f32 %v112, %v471
    %v473 = vpop.f32.mrf.mxu0
    %v474 = vpop.f32.mrf.mxu0
    %v475 = vadd.f32 %v112, %v474
    %v476 = vpop.f32.mrf.mxu0
    %477 = vmatprep.mubr.bf16.mxu0 0
    %478 = vmatmul.mubr.bf16.gmra.mxu0 %v308
    %v479 = vpop.f32.mrf.mxu0
    %v480 = vadd.f32 %v112, %v479
    %v481 = vpop.f32.mrf.mxu0
    %v482 = vpop.f32.mrf.mxu0
    %v483 = vadd.f32 %v112, %v482
    %v484 = vpop.f32.mrf.mxu0
    %485 = vmatprep.mubr.bf16.mxu0 0
    %486 = vmatmul.mubr.bf16.gmra.mxu0 %v311
    %v487 = vpop.f32.mrf.mxu0
    %v488 = vadd.f32 %v112, %v487
    %v489 = vpop.f32.mrf.mxu0
    %v490 = vpop.f32.mrf.mxu0
    %v491 = vadd.f32 %v112, %v490
    %v492 = vpop.f32.mrf.mxu0
    %493 = vmatprep.mubr.bf16.mxu0 0
    %494 = vmatmul.mubr.bf16.gmra.mxu0 %v314
    %v495 = vpop.f32.mrf.mxu0
    %v496 = vadd.f32 %v112, %v495
    %v497 = vpop.f32.mrf.mxu0
    %v498 = vpop.f32.mrf.mxu0
    %v499 = vadd.f32 %v112, %v498
    %v500 = vpop.f32.mrf.mxu0
    %501 = vmatprep.mubr.bf16.mxu0 0
    %502 = vmatmul.mubr.bf16.gmra.mxu0 %v317
    %v503 = vpop.f32.mrf.mxu0
    %v504 = vadd.f32 %v112, %v503
    %v505 = vpop.f32.mrf.mxu0
    %v506 = vpop.f32.mrf.mxu0
    %v507 = vadd.f32 %v112, %v506
    %v508 = vpop.f32.mrf.mxu0
    %509 = vmatprep.mubr.bf16.mxu0 0
    %510 = vmatmul.mubr.bf16.gmra.mxu0 %v320
    %v511 = vpop.f32.mrf.mxu0
    %v512 = vadd.f32 %v112, %v511
    %v513 = vpop.f32.mrf.mxu0
    %v514 = vpop.f32.mrf.mxu0
    %v515 = vadd.f32 %v112, %v514
    %v516 = vpop.f32.mrf.mxu0
    %517 = vmatprep.mubr.bf16.mxu0 0
    %518 = vmatmul.mubr.bf16.gmra.mxu0 %v323
    %v519 = vpop.f32.mrf.mxu0
    %v520 = vadd.f32 %v112, %v519
    %v521 = vpop.f32.mrf.mxu0
    %v522 = vpop.f32.mrf.mxu0
    %v523 = vadd.f32 %v112, %v522
    %v524 = vpop.f32.mrf.mxu0
    %525 = vmatprep.mubr.bf16.mxu0 0
    %526 = vmatmul.mubr.bf16.gmra.mxu0 %v326
    %v527 = vpop.f32.mrf.mxu0
    %v528 = vadd.f32 %v112, %v527
    %v529 = vpop.f32.mrf.mxu0
    %v530 = vpop.f32.mrf.mxu0
    %v531 = vadd.f32 %v112, %v530
    %v532 = vpop.f32.mrf.mxu0
    %533 = vmatprep.mubr.bf16.mxu0 0
    %534 = vmatmul.mubr.bf16.gmra.mxu0 %v329
    %v535 = vpop.f32.mrf.mxu0
    %v536 = vadd.f32 %v112, %v535
    %v537 = vpop.f32.mrf.mxu0
    %v538 = vpop.f32.mrf.mxu0
    %v539 = vadd.f32 %v112, %v538
    %v540 = vpop.f32.mrf.mxu0
    %541 = vmatprep.mubr.bf16.mxu0 0
    %542 = vmatmul.mubr.bf16.gmra.mxu0 %v332
    %v543 = vpop.f32.mrf.mxu0
    %v544 = vadd.f32 %v112, %v543
    %v545 = vpop.f32.mrf.mxu0
    %v546 = vpop.f32.mrf.mxu0
    %v547 = vadd.f32 %v112, %v546
    %v548 = vpop.f32.mrf.mxu0
    %549 = vmatprep.mubr.bf16.mxu0 0
    %550 = vmatmul.mubr.bf16.gmra.mxu0 %v335
    %v551 = vpop.f32.mrf.mxu0
    %v552 = vadd.f32 %v112, %v551
    %v553 = vpop.f32.mrf.mxu0
    %v554 = vpop.f32.mrf.mxu0
    %v555 = vadd.f32 %v112, %v554
    %v556 = vpop.f32.mrf.mxu0
    %557 = vmatprep.mubr.bf16.mxu0 0
    %558 = vmatmul.mubr.bf16.gmra.mxu0 %v338
    %v559 = vpop.f32.mrf.mxu0
    %v560 = vadd.f32 %v112, %v559
    %v561 = vpop.f32.mrf.mxu0
    %v562 = vpop.f32.mrf.mxu0
    %v563 = vadd.f32 %v112, %v562
    %v564 = vpop.f32.mrf.mxu0
    %565 = vmatprep.mubr.bf16.mxu0 0
    %566 = vmatmul.mubr.bf16.gmra.mxu0 %v341
    %v567 = vpop.f32.mrf.mxu0
    %v568 = vadd.f32 %v112, %v567
    %v569 = vpop.f32.mrf.mxu0
    %v570 = vpop.f32.mrf.mxu0
    %v571 = vadd.f32 %v112, %v570
    %v572 = vpop.f32.mrf.mxu0
    %573 = vmatprep.mubr.bf16.mxu0 0
    %574 = vmatmul.mubr.bf16.gmra.mxu0 %v344
    %v575 = vpop.f32.mrf.mxu0
    %v576 = vadd.f32 %v112, %v575
    %v577 = vpop.f32.mrf.mxu0
    %v578 = vpop.f32.mrf.mxu0
    %v579 = vadd.f32 %v112, %v578
    %v580 = vpop.f32.mrf.mxu0
    %581 = vmatprep.mubr.bf16.mxu0 0
    %582 = vmatmul.mubr.bf16.gmra.mxu0 %v347
    %v583 = vpop.f32.mrf.mxu0
    %v584 = vadd.f32 %v112, %v583
    %v585 = vpop.f32.mrf.mxu0
    %v586 = vpop.f32.mrf.mxu0
    %v587 = vadd.f32 %v112, %v586
    %v588 = vpop.f32.mrf.mxu0
    %589 = vmatprep.mubr.bf16.mxu0 0
    %590 = vmatmul.mubr.bf16.gmra.mxu0 %v350
    %v591 = vpop.f32.mrf.mxu0
    %v592 = vadd.f32 %v112, %v591
    %v593 = vpop.f32.mrf.mxu0
    %v594 = vpop.f32.mrf.mxu0
    %v595 = vadd.f32 %v112, %v594
    %v596 = vpop.f32.mrf.mxu0
    %597 = vmatprep.mubr.bf16.mxu0 0
    %598 = vmatmul.mubr.bf16.gmra.mxu0 %v353
    %v599 = vpop.f32.mrf.mxu0
    %v600 = vadd.f32 %v112, %v599
    %v601 = vpop.f32.mrf.mxu0
    %v602 = vpop.f32.mrf.mxu0
    %v603 = vadd.f32 %v112, %v602
    %v604 = vpop.f32.mrf.mxu0
    %605 = vmatprep.mubr.bf16.mxu0 0
    %606 = vmatmul.mubr.bf16.gmra.mxu0 %v356
    %v607 = vpop.f32.mrf.mxu0
    %v608 = vadd.f32 %v112, %v607
    %v609 = vpop.f32.mrf.mxu0
    %v610 = vpop.f32.mrf.mxu0
    %v611 = vadd.f32 %v112, %v610
    %v612 = vpop.f32.mrf.mxu0
    %613 = vmatprep.mubr.bf16.mxu0 0
    %614 = vmatmul.mubr.bf16.gmra.mxu0 %v359
    %v615 = vpop.f32.mrf.mxu0
    %v616 = vadd.f32 %v112, %v615
    %v617 = vpop.f32.mrf.mxu0
    %v618 = vpop.f32.mrf.mxu0
    %v619 = vadd.f32 %v112, %v618
    %v620 = vpop.f32.mrf.mxu0
    %621 = vmatprep.mubr.bf16.mxu0 0
    %622 = vmatmul.mubr.bf16.gmra.mxu0 %v362
    %v623 = vpop.f32.mrf.mxu0
    %v624 = vadd.f32 %v112, %v623
    %v625 = vpop.f32.mrf.mxu0
    %v626 = vpop.f32.mrf.mxu0
    %v627 = vadd.f32 %v112, %v626
    %v628 = vpop.f32.mrf.mxu0
    %629 = vmatprep.mubr.bf16.mxu0 0
    %630 = vmatmul.mubr.bf16.gmra.mxu0 %v365
    %v631 = vpop.f32.mrf.mxu0
    %v632 = vadd.f32 %v112, %v631
    %v633 = vpop.f32.mrf.mxu0
    %v634 = vpop.f32.mrf.mxu0
    %v635 = vadd.f32 %v112, %v634
    %v636 = vpop.f32.mrf.mxu0
    %637 = vmatprep.mubr.bf16.mxu0 0
    %638 = vmatmul.mubr.bf16.gmra.mxu0 %v368
    %v639 = vpop.f32.mrf.mxu0
    %v640 = vadd.f32 %v112, %v639
    %v641 = vpop.f32.mrf.mxu0
    %v642 = vpop.f32.mrf.mxu0
    %v643 = vadd.f32 %v112, %v642
    %v644 = vpop.f32.mrf.mxu0
    %645 = vmatprep.mubr.bf16.mxu0 0
    %646 = vmatmul.mubr.bf16.gmra.mxu0 %v371
    %v647 = vpop.f32.mrf.mxu0
    %v648 = vadd.f32 %v112, %v647
    %v649 = vpop.f32.mrf.mxu0
    %v650 = vpop.f32.mrf.mxu0
    %v651 = vadd.f32 %v112, %v650
    %v652 = vpop.f32.mrf.mxu0
    %653 = vmatprep.mubr.bf16.mxu0 0
    %654 = vmatmul.mubr.bf16.gmra.mxu0 %v374
    %v655 = vpop.f32.mrf.mxu0
    %v656 = vadd.f32 %v112, %v655
    %v657 = vpop.f32.mrf.mxu0
    %v658 = vpop.f32.mrf.mxu0
    %v659 = vadd.f32 %v112, %v658
    %v660 = vpop.f32.mrf.mxu0
    %661 = vmatprep.mubr.bf16.mxu0 0
    %662 = vmatmul.mubr.bf16.gmra.mxu0 %v377
    %v663 = vpop.f32.mrf.mxu0
    %v664 = vadd.f32 %v112, %v663
    %v665 = vpop.f32.mrf.mxu0
    %v666 = vpop.f32.mrf.mxu0
    %v667 = vadd.f32 %v112, %v666
    %v668 = vpop.f32.mrf.mxu0
    %669 = vmatprep.mubr.bf16.mxu0 0
    %670 = vmatmul.mubr.bf16.gmra.mxu0 %v380
    %v671 = vpop.f32.mrf.mxu0
    %v672 = vadd.f32 %v112, %v671
    %v673 = vpop.f32.mrf.mxu0
    %v674 = vpop.f32.mrf.mxu0
    %v675 = vadd.f32 %v112, %v674
    %v676 = vpop.f32.mrf.mxu0
    %677 = vdwg.mxu0
    %v678 = vmax.f32 %v424, 0.0
    %v679 = vmax.f32 %v427, 0.0
    %v680 = vmax.f32 %v432, 0.0
    %v681 = vmax.f32 %v435, 0.0
    %v682 = vmax.f32 %v440, 0.0
    %v683 = vmax.f32 %v443, 0.0
    %v684 = vmax.f32 %v448, 0.0
    %v685 = vmax.f32 %v451, 0.0
    %v686 = vmax.f32 %v456, 0.0
    %v687 = vmax.f32 %v459, 0.0
    %v688 = vmax.f32 %v464, 0.0
    %v689 = vmax.f32 %v467, 0.0
    %v690 = vmax.f32 %v472, 0.0
    %v691 = vmax.f32 %v475, 0.0
    %v692 = vmax.f32 %v480, 0.0
    %v693 = vmax.f32 %v483, 0.0
    %v694 = vmax.f32 %v488, 0.0
    %v695 = vmax.f32 %v491, 0.0
    %v696 = vmax.f32 %v496, 0.0
    %v697 = vmax.f32 %v499, 0.0
    %v698 = vmax.f32 %v504, 0.0
    %v699 = vmax.f32 %v507, 0.0
    %v700 = vmax.f32 %v512, 0.0
    %v701 = vmax.f32 %v515, 0.0
    %v702 = vmax.f32 %v520, 0.0
    %v703 = vmax.f32 %v523, 0.0
    %v704 = vmax.f32 %v528, 0.0
    %v705 = vmax.f32 %v531, 0.0
    %v706 = vmax.f32 %v536, 0.0
    %v707 = vmax.f32 %v539, 0.0
    %v708 = vmax.f32 %v544, 0.0
    %v709 = vmax.f32 %v547, 0.0
    %v710 = vmax.f32 %v552, 0.0
    %v711 = vmax.f32 %v555, 0.0
    %v712 = vmax.f32 %v560, 0.0
    %v713 = vmax.f32 %v563, 0.0
    %v714 = vmax.f32 %v568, 0.0
    %v715 = vmax.f32 %v571, 0.0
    %v716 = vmax.f32 %v576, 0.0
    %v717 = vmax.f32 %v579, 0.0
    %v718 = vmax.f32 %v584, 0.0
    %v719 = vmax.f32 %v587, 0.0
    %v720 = vmax.f32 %v592, 0.0
    %v721 = vmax.f32 %v595, 0.0
    %v722 = vmax.f32 %v600, 0.0
    %v723 = vmax.f32 %v603, 0.0
    %v724 = vmax.f32 %v608, 0.0
    %v725 = vmax.f32 %v611, 0.0
    %v726 = vmax.f32 %v616, 0.0
    %v727 = vmax.f32 %v619, 0.0
    %v728 = vmax.f32 %v624, 0.0
    %v729 = vmax.f32 %v627, 0.0
    %v730 = vmax.f32 %v632, 0.0
    %v731 = vmax.f32 %v635, 0.0
    %v732 = vmax.f32 %v640, 0.0
    %v733 = vmax.f32 %v643, 0.0
    %v734 = vmax.f32 %v648, 0.0
    %v735 = vmax.f32 %v651, 0.0
    %v736 = vmax.f32 %v656, 0.0
    %v737 = vmax.f32 %v659, 0.0
    %v738 = vmax.f32 %v664, 0.0
    %v739 = vmax.f32 %v667, 0.0
    %v740 = vmax.f32 %v672, 0.0
    %v741 = vmax.f32 %v675, 0.0
    %v742 = vld [vmem:[#allocation2] sm:$0x3]
    %v743 = vadd.f32 %v678, %v679
    %v744 = vadd.f32 %v743, %v680
    %v745 = vadd.f32 %v744, %v681
    %v746 = vadd.f32 %v745, %v682
    %v747 = vadd.f32 %v746, %v683
    %v748 = vadd.f32 %v747, %v684
    %v749 = vadd.f32 %v748, %v685
    %v750 = vadd.f32 %v749, %v686
    %v751 = vadd.f32 %v750, %v687
    %v752 = vadd.f32 %v751, %v688
    %v753 = vadd.f32 %v752, %v689
    %v754 = vadd.f32 %v753, %v690
    %v755 = vadd.f32 %v754, %v691
    %v756 = vadd.f32 %v755, %v692
    %v757 = vadd.f32 %v756, %v693
    %v758 = vadd.f32 %v757, %v694
    %v759 = vadd.f32 %v758, %v695
    %v760 = vadd.f32 %v759, %v696
    %v761 = vadd.f32 %v760, %v697
    %v762 = vadd.f32 %v761, %v698
    %v763 = vadd.f32 %v762, %v699
    %v764 = vadd.f32 %v763, %v700
    %v765 = vadd.f32 %v764, %v701
    %v766 = vadd.f32 %v765, %v702
    %v767 = vadd.f32 %v766, %v703
    %v768 = vadd.f32 %v767, %v704
    %v769 = vadd.f32 %v768, %v705
    %v770 = vadd.f32 %v769, %v706
    %v771 = vadd.f32 %v770, %v707
    %v772 = vadd.f32 %v771, %v708
    %v773 = vadd.f32 %v772, %v709
    %v774 = vrot.slane %v773, 4
    %v775 = vadd.f32 %v773, %v774
    %v776 = vrot.slane %v775, 2
    %v777 = vadd.f32 %v775, %v776
    %v778 = vrot.slane %v777, 1
    %v779 = vadd.f32 %v777, %v778
    %v780 = vadd.f32 %v710, %v711
    %v781 = vadd.f32 %v780, %v712
    %v782 = vadd.f32 %v781, %v713
    %v783 = vadd.f32 %v782, %v714
    %v784 = vadd.f32 %v783, %v715
    %v785 = vadd.f32 %v784, %v716
    %v786 = vadd.f32 %v785, %v717
    %v787 = vadd.f32 %v786, %v718
    %v788 = vadd.f32 %v787, %v719
    %v789 = vadd.f32 %v788, %v720
    %v790 = vadd.f32 %v789, %v721
    %v791 = vadd.f32 %v790, %v722
    %v792 = vadd.f32 %v791, %v723
    %v793 = vadd.f32 %v792, %v724
    %v794 = vadd.f32 %v793, %v725
    %v795 = vadd.f32 %v794, %v726
    %v796 = vadd.f32 %v795, %v727
    %v797 = vadd.f32 %v796, %v728
    %v798 = vadd.f32 %v797, %v729
    %v799 = vadd.f32 %v798, %v730
    %v800 = vadd.f32 %v799, %v731
    %v801 = vadd.f32 %v800, %v732
    %v802 = vadd.f32 %v801, %v733
    %v803 = vadd.f32 %v802, %v734
    %v804 = vadd.f32 %v803, %v735
    %v805 = vadd.f32 %v804, %v736
    %v806 = vadd.f32 %v805, %v737
    %v807 = vadd.f32 %v806, %v738
    %v808 = vadd.f32 %v807, %v739
    %v809 = vadd.f32 %v808, %v740
    %v810 = vadd.f32 %v809, %v741
    %v811 = vrot.slane %v810, 4
    %v812 = vadd.f32 %v810, %v811
    %v813 = vrot.slane %v812, 2
    %v814 = vadd.f32 %v812, %v813
    %v815 = vrot.slane %v814, 1
    %v816 = vadd.f32 %v814, %v815
    %vm819 = vcmask 1041409
    %v820 = vsel %vm819, %v816, %v779
    %v822 = vadd.f32 %v742, %v820
    %823 = vst [vmem:[#allocation2] sm:$0x3] %v822
    // Predicated region
    $region42: #{model_forward.1} parent=1 // pred_check
      %p824 = pneg %p34
    $region43: #{model_forward.1} parent=1 // pred_check_branch
      %826 = sbr.rel (%p824) target = $region45
    $region44: #{model_forward.1} parent=1 // pred_region
      %v827 = vld [vmem:[#allocation2] sm:$0x3]
      %v828 = vmul.f32 %v827, 0.00390625
      %v829 = vpack.c.bf16 %v828, %v828
      %v830 = vld [vmem:[%s3] sm:$0xf]
      %v831 = vld [vmem:[%s3 + $0x4] sm:$0xf]
      %v832 = vld [vmem:[%s3 + $0x8] sm:$0xf]
      %v833 = vld [vmem:[%s3 + $0xc] sm:$0xf]
      %v834 = vld [vmem:[%s3 + $0x10] sm:$0xf]
      %v835 = vld [vmem:[%s3 + $0x14] sm:$0xf]
      %v836 = vld [vmem:[%s3 + $0x18] sm:$0xf]
      %v837 = vld [vmem:[%s3 + $0x1c] sm:$0xf]
      %v838 = vld [vmem:[%s3 + $0x20] sm:$0xf]
      %v839 = vld [vmem:[%s3 + $0x24] sm:$0xf]
      %v840 = vld [vmem:[%s3 + $0x28] sm:$0xf]
      %v841 = vld [vmem:[%s3 + $0x2c] sm:$0xf]
      %v842 = vld [vmem:[%s3 + $0x30] sm:$0xf]
      %v843 = vld [vmem:[%s3 + $0x34] sm:$0xf]
      %v844 = vld [vmem:[%s3 + $0x38] sm:$0xf]
      %v845 = vld [vmem:[%s3 + $0x3c] sm:$0xf]
      %v846 = vld [vmem:[%s4] sm:$0x1]
      %v848 = vlaneseq
      %v849 = vshrl.u32 %v848, 7
      %v850 = vsub.s32 0, %v849
      %v851 = vrot.slane %v846, %v850
      %v869 = vunpack.c.l.b16 %v830
      %v870 = vunpack.c.l.b16 %v831
      %v871 = vunpack.c.l.b16 %v832
      %v872 = vunpack.c.l.b16 %v833
      %v873 = vunpack.c.l.b16 %v834
      %v874 = vunpack.c.l.b16 %v835
      %v875 = vunpack.c.l.b16 %v836
      %v876 = vunpack.c.l.b16 %v837
      %v877 = vunpack.c.l.b16 %v838
      %v878 = vunpack.c.l.b16 %v839
      %v879 = vunpack.c.l.b16 %v840
      %v880 = vunpack.c.l.b16 %v841
      %v881 = vunpack.c.l.b16 %v842
      %v882 = vunpack.c.l.b16 %v843
      %v883 = vunpack.c.l.b16 %v844
      %v884 = vunpack.c.l.b16 %v845
      %v885 = vpack.c.b16 %v870, %v869
      %v886 = vpack.c.b16 %v872, %v871
      %v887 = vpack.c.b16 %v874, %v873
      %v888 = vpack.c.b16 %v876, %v875
      %v889 = vpack.c.b16 %v878, %v877
      %v890 = vpack.c.b16 %v880, %v879
      %v891 = vpack.c.b16 %v882, %v881
      %v892 = vpack.c.b16 %v884, %v883
      %901 = vmatprep.subr.bf16.mxu0 0
      %902 = vmatpush1.bf16.msra.mxu0 %v892
      %903 = vmatprep.subr.bf16.mxu0 0
      %904 = vmatpush1.bf16.msra.mxu0 %v891
      %905 = vmatprep.subr.bf16.mxu0 0
      %906 = vmatpush1.bf16.msra.mxu0 %v890
      %907 = vmatprep.subr.bf16.mxu0 0
      %908 = vmatpush1.bf16.msra.mxu0 %v889
      %909 = vmatprep.subr.bf16.mxu0 0
      %910 = vmatpush1.bf16.msra.mxu0 %v888
      %911 = vmatprep.subr.bf16.mxu0 0
      %912 = vmatpush1.bf16.msra.mxu0 %v887
      %913 = vmatprep.subr.bf16.mxu0 0
      %914 = vmatpush1.bf16.msra.mxu0 %v886
      %915 = vmatprep.subr.bf16.mxu0 0
      %916 = vmatpush1.bf16.msra.mxu0 %v885
      %917 = vmatprep.subr.bf16.mxu0 0
      %918 = vmatpush2.bf16.msra.mxu0 0
      %919 = vmatprep.subr.bf16.mxu0 0
      %920 = vmatpush2.bf16.msra.mxu0 0
      %921 = vmatprep.subr.bf16.mxu0 0
      %922 = vmatpush2.bf16.msra.mxu0 0
      %923 = vmatprep.subr.bf16.mxu0 0
      %924 = vmatpush2.bf16.msra.mxu0 0
      %925 = vmatprep.subr.bf16.mxu0 0
      %926 = vmatpush2.bf16.msra.mxu0 0
      %927 = vmatprep.subr.bf16.mxu0 0
      %928 = vmatpush2.bf16.msra.mxu0 0
      %929 = vmatprep.subr.bf16.mxu0 0
      %930 = vmatpush2.bf16.msra.mxu0 0
      %931 = vmatprep.subr.bf16.mxu0 0
      %932 = vmatpush2.bf16.msra.mxu0 0
      %933 = vmatprep.mubr.bf16.mxu0 0
      %934 = vmatmul.mubr.bf16.gmra.mxu0 %v829
      %v935 = vpop.f32.mrf.mxu0
      %v936 = vadd.f32 %v851, %v935
      %v937 = vpop.f32.mrf.mxu0
      %v938 = vpop.f32.mrf.mxu0
      %v939 = vpop.f32.mrf.mxu0
      %940 = vdwg.mxu0
      %vm941 = vcmask 1041408
      %v942 = vsel %vm941, %v936, 0.0
      %v943 = vrot.slane %v942, 4
      %v944 = vadd.f32 %v942, %v943
      %v945 = vrot.slane %v944, 2
      %v946 = vadd.f32 %v944, %v945
      %v947 = vrot.slane %v946, 1
      %v948 = vadd.f32 %v946, %v947
      %v949 = vrcp.pop 2.0
      %v950 = vmul.f32 %v948, %v949
      %v951 = vsub.f32 %v936, %v950
      %v952 = vmul.f32 %v951, %v951
      %v953 = vsel %vm941, %v952, 0.0
      %v954 = vrot.slane %v953, 4
      %v955 = vadd.f32 %v953, %v954
      %v956 = vrot.slane %v955, 2
      %v957 = vadd.f32 %v955, %v956
      %v958 = vrot.slane %v957, 1
      %v959 = vadd.f32 %v957, %v958
      %v960 = vmul.f32 %v959, %v949
      %v961 = vld [vmem:[%s5] sm:$0x1]
      %v962 = vadd.f32 %v960, 1e-05
      %v963 = vrsqrt.pop %v962
      %v964 = vmul.f32 %v961, %v963
      %v965 = vld [vmem:[%s6] sm:$0x1]
      %v966 = vmul.f32 %v950, %v964
      %v967 = vsub.f32 %v965, %v966
      %v969 = vlaneseq
      %v970 = vshrl.u32 %v969, 7
      %v971 = vsub.s32 0, %v970
      %v972 = vrot.slane %v964, %v971
      %v974 = vmul.f32 %v936, %v972
      %v976 = vlaneseq
      %v977 = vshrl.u32 %v976, 7
      %v978 = vsub.s32 0, %v977
      %v979 = vrot.slane %v967, %v978
      %v981 = vadd.f32 %v974, %v979
      %vm982 = vcmp.ge.f32.partialorder %v981, 0.0
      %v983 = vmul.f32 %v981, 0.01
      %v984 = vsel %vm982, %v981, %v983
      %v985 = vpack.c.bf16 %v984, %v984
      %v986 = vld [vmem:[%s7] sm:$0xf]
      %v987 = vld [vmem:[%s7 + $0x4] sm:$0xf]
      %v988 = vld [vmem:[%s7 + $0x8] sm:$0xf]
      %v989 = vld [vmem:[%s7 + $0xc] sm:$0xf]
      %v990 = vld [vmem:[%s7 + $0x10] sm:$0xf]
      %v991 = vld [vmem:[%s7 + $0x14] sm:$0xf]
      %v992 = vld [vmem:[%s7 + $0x18] sm:$0xf]
      %v993 = vld [vmem:[%s7 + $0x1c] sm:$0xf]
      %v994 = vld [vmem:[%s7 + $0x20] sm:$0xf]
      %v995 = vld [vmem:[%s7 + $0x24] sm:$0xf]
      %v996 = vld [vmem:[%s7 + $0x28] sm:$0xf]
      %v997 = vld [vmem:[%s7 + $0x2c] sm:$0xf]
      %v998 = vld [vmem:[%s7 + $0x30] sm:$0xf]
      %v999 = vld [vmem:[%s7 + $0x34] sm:$0xf]
      %v1000 = vld [vmem:[%s7 + $0x38] sm:$0xf]
      %v1001 = vld [vmem:[%s7 + $0x3c] sm:$0xf]
      %v1002 = vld [vmem:[%s8] sm:$0x1]
      %v1004 = vlaneseq
      %v1005 = vshrl.u32 %v1004, 7
      %v1006 = vsub.s32 0, %v1005
      %v1007 = vrot.slane %v1002, %v1006
      %v1025 = vunpack.c.l.b16 %v986
      %v1026 = vunpack.c.l.b16 %v987
      %v1027 = vunpack.c.l.b16 %v988
      %v1028 = vunpack.c.l.b16 %v989
      %v1029 = vunpack.c.l.b16 %v990
      %v1030 = vunpack.c.l.b16 %v991
      %v1031 = vunpack.c.l.b16 %v992
      %v1032 = vunpack.c.l.b16 %v993
      %v1033 = vunpack.c.l.b16 %v994
      %v1034 = vunpack.c.l.b16 %v995
      %v1035 = vunpack.c.l.b16 %v996
      %v1036 = vunpack.c.l.b16 %v997
      %v1037 = vunpack.c.l.b16 %v998
      %v1038 = vunpack.c.l.b16 %v999
      %v1039 = vunpack.c.l.b16 %v1000
      %v1040 = vunpack.c.l.b16 %v1001
      %v1041 = vpack.c.b16 %v1026, %v1025
      %v1042 = vpack.c.b16 %v1028, %v1027
      %v1043 = vpack.c.b16 %v1030, %v1029
      %v1044 = vpack.c.b16 %v1032, %v1031
      %v1045 = vpack.c.b16 %v1034, %v1033
      %v1046 = vpack.c.b16 %v1036, %v1035
      %v1047 = vpack.c.b16 %v1038, %v1037
      %v1048 = vpack.c.b16 %v1040, %v1039
      %1057 = vmatprep.subr.bf16.mxu0 0
      %1058 = vmatpush1.bf16.msra.mxu0 %v1048
      %1059 = vmatprep.subr.bf16.mxu0 0
      %1060 = vmatpush1.bf16.msra.mxu0 %v1047
      %1061 = vmatprep.subr.bf16.mxu0 0
      %1062 = vmatpush1.bf16.msra.mxu0 %v1046
      %1063 = vmatprep.subr.bf16.mxu0 0
      %1064 = vmatpush1.bf16.msra.mxu0 %v1045
      %1065 = vmatprep.subr.bf16.mxu0 0
      %1066 = vmatpush1.bf16.msra.mxu0 %v1044
      %1067 = vmatprep.subr.bf16.mxu0 0
      %1068 = vmatpush1.bf16.msra.mxu0 %v1043
      %1069 = vmatprep.subr.bf16.mxu0 0
      %1070 = vmatpush1.bf16.msra.mxu0 %v1042
      %1071 = vmatprep.subr.bf16.mxu0 0
      %1072 = vmatpush1.bf16.msra.mxu0 %v1041
      %1073 = vmatprep.subr.bf16.mxu0 0
      %1074 = vmatpush2.bf16.msra.mxu0 0
      %1075 = vmatprep.subr.bf16.mxu0 0
      %1076 = vmatpush2.bf16.msra.mxu0 0
      %1077 = vmatprep.subr.bf16.mxu0 0
      %1078 = vmatpush2.bf16.msra.mxu0 0
      %1079 = vmatprep.subr.bf16.mxu0 0
      %1080 = vmatpush2.bf16.msra.mxu0 0
      %1081 = vmatprep.subr.bf16.mxu0 0
      %1082 = vmatpush2.bf16.msra.mxu0 0
      %1083 = vmatprep.subr.bf16.mxu0 0
      %1084 = vmatpush2.bf16.msra.mxu0 0
      %1085 = vmatprep.subr.bf16.mxu0 0
      %1086 = vmatpush2.bf16.msra.mxu0 0
      %1087 = vmatprep.subr.bf16.mxu0 0
      %1088 = vmatpush2.bf16.msra.mxu0 0
      %1089 = vmatprep.mubr.bf16.mxu0 0
      %1090 = vmatmul.mubr.bf16.gmra.mxu0 %v985
      %v1091 = vpop.f32.mrf.mxu0
      %v1092 = vadd.f32 %v1007, %v1091
      %v1093 = vpop.f32.mrf.mxu0
      %v1094 = vpop.f32.mrf.mxu0
      %v1095 = vpop.f32.mrf.mxu0
      %1096 = vdwg.mxu0
      %1097 = vst [vmem:[#allocation3] sm:$0x3] %v1092
    $region45: #{model_forward.1} parent=1 // pred_fallthru
      _
    // Predicated region
    $region46: #{model_forward.1} parent=1 // pred_check
      _
    $region47: #{model_forward.1} parent=1 // pred_check_branch
      %1099 = sbr.rel (0) target = $region49
    $region48: #{model_forward.1} parent=1 // pred_region
      %s1101 = ssub.s32 32, 32
      %1102 = vsyncadd [#allocation4], %s1101
      %s1104 = sshll.u32 [#allocation3], 4
      %s1105 = int_to_ptr.vmem [resolvable:$true] %s1104
      %1107 = dma.vmem_to_hbm [thread:$0]  %s1105, 32, %s9, [#allocation4]
    $region49: #{model_forward.1} parent=1 // pred_fallthru
      _
    // Predicated region
    $region50: #{model_forward.1} parent=1 // pred_check
      _
    $region51: #{model_forward.1} parent=1 // pred_check_branch
      %1109 = sbr.rel (0) target = $region53
    $region52: #{model_forward.1} parent=1 // pred_region
      %1110 = dma.done [#allocation4], 32
    $region53: #{model_forward.1} parent=1 // pred_fallthru
      _
    %1111 = vsyncpa [#allocation4], 1

</llo_original>
